<compile_context>
chip_gen: v7x
topology: tpu7x:2x2x1
jax: 0.10.0
libtpu: 0.0.40
codegen_flags: <defaults>
</compile_context>

<pallas_src>
import functools

import jax
import jax.numpy as jnp
from jax.experimental import pallas as pl
from jax.experimental.pallas import tpu as pltpu


LANE = 128          # lane width / alignment target for feature dims
SUBLANE = 8         # sublane alignment for the batch (second-minor) dim
MAX_TILE_M = 512    # batch-tile rows (f32 mem-roofline sweet spot per measurements)


def _round_up(x: int, m: int) -> int:
    return ((x + m - 1) // m) * m


def _pad_to(a, shape, dtype):
    """Zero-pad `a` (cast to `dtype`) up to `shape`; no-op copy avoided when aligned."""
    a = a.astype(dtype)
    if tuple(a.shape) == tuple(shape):
        return a
    pads = [(0, t - s) for s, t in zip(a.shape, shape)]
    return jnp.pad(a, pads)


def mlp_kernel(x_ref, w1_ref, b1_ref, w2_ref, b2_ref, o_ref):
    """One batch tile: (TM, D) @ (D, H) + b1 -> ReLU -> @ (H, C) + b2 -> (TM, C).

    Matmuls run on the MXU in the operand dtype (f32 or bf16) with f32
    accumulation; bias add and ReLU are done in f32 on the VPU.
    """
    x = x_ref[...]                                              # (TM, D) compute dtype
    h = jnp.dot(x, w1_ref[...], preferred_element_type=jnp.float32)
    h = jnp.maximum(h + b1_ref[...], 0.0)                       # f32 bias + ReLU
    h = h.astype(w2_ref.dtype)                                  # back to MXU dtype
    out = jnp.dot(h, w2_ref[...], preferred_element_type=jnp.float32)
    o_ref[...] = (out + b2_ref[...]).astype(o_ref.dtype)        # f32 bias, lane-dense store


@functools.partial(jax.jit, static_argnames=("compute_dtype", "tile_m"))
def mlp_forward(x, w1, b1, w2, b2, *, compute_dtype=jnp.float32, tile_m=MAX_TILE_M):
    """Fused MLP forward. w1: (D_in, H), b1: (1, H), w2: (H, C), b2: (1, C)."""
    B, D_in = x.shape
    H = w1.shape[1]
    C = w2.shape[1]

    compute_dtype = jnp.dtype(compute_dtype)
    itemsize = compute_dtype.itemsize

    # ---- pad feature dims to lane-dense / MXU-friendly multiples of 128 ----
    D_p = _round_up(D_in, LANE)
    H_p = _round_up(H, LANE)
    C_p = _round_up(C, LANE)

    # ---- batch tiling: TM rows per grid step, pad batch to a multiple of TM ----
    TM = min(tile_m, _round_up(B, SUBLANE))
    B_p = _round_up(B, TM)

    xp = _pad_to(x, (B_p, D_p), compute_dtype)
    w1p = _pad_to(w1, (D_p, H_p), compute_dtype)
    w2p = _pad_to(w2, (H_p, C_p), compute_dtype)
    # Biases stay f32: bias add + ReLU are done in f32 inside the kernel.
    b1p = _pad_to(b1.reshape(1, -1), (1, H_p), jnp.float32)
    b2p = _pad_to(b2.reshape(1, -1), (1, C_p), jnp.float32)

    grid = (B_p // TM,)

    # ---- VMEM budget: resident weights/biases + double-buffered x/out tiles ----
    weight_bytes = (D_p * H_p + H_p * C_p) * itemsize + (H_p + C_p) * 4
    tile_bytes = 2 * (TM * D_p * itemsize + TM * C_p * 4)       # double-buffered
    scratch_bytes = TM * H_p * 4                                # hidden intermediate
    needed = weight_bytes + tile_bytes + scratch_bytes
    # Raise the scoped limit only as far as needed; cap at 64 MiB so the same
    # plan also fits v7x's smaller physical VMEM.
    vmem_limit = int(min(64 << 20, max(32 << 20, 2 * needed)))

    flops = 2 * B_p * (D_p * H_p + H_p * C_p)
    bytes_accessed = (
        (B_p * D_p + D_p * H_p + H_p * C_p) * itemsize   # x + weights in
        + (H_p + C_p) * 4                                # biases in
        + B_p * C_p * 4                                  # output out
    )

    out_p = pl.pallas_call(
        mlp_kernel,
        out_shape=jax.ShapeDtypeStruct((B_p, C_p), jnp.float32),
        grid=grid,
        in_specs=[
            pl.BlockSpec((TM, D_p), lambda i: (i, 0)),    # x: streamed per batch tile
            pl.BlockSpec((D_p, H_p), lambda i: (0, 0)),   # W1: VMEM-resident
            pl.BlockSpec((1, H_p), lambda i: (0, 0)),     # b1: VMEM-resident
            pl.BlockSpec((H_p, C_p), lambda i: (0, 0)),   # W2: VMEM-resident
            pl.BlockSpec((1, C_p), lambda i: (0, 0)),     # b2: VMEM-resident
        ],
        out_specs=pl.BlockSpec((TM, C_p), lambda i: (i, 0)),
        compiler_params=pltpu.CompilerParams(
            dimension_semantics=("parallel",),            # use both TCs on v7x
            vmem_limit_bytes=vmem_limit,
        ),
        cost_estimate=pl.CostEstimate(
            flops=flops, transcendentals=0, bytes_accessed=bytes_accessed),
    )(xp, w1p, b1p, w2p, b2p)

    # Slice the real (unpadded) result back out.
    return out_p[:B, :C]


def init_linear_params(key, fan_in, fan_out):
    """Deterministic init mimicking PyTorch nn.Linear defaults:
    U(-1/sqrt(fan_in), 1/sqrt(fan_in)) for both weight and bias.
    Weight is stored transposed: shape (fan_in, fan_out)."""
    kw, kb = jax.random.split(key)
    bound = 1.0 / jnp.sqrt(jnp.float32(fan_in))
    w = jax.random.uniform(kw, (fan_in, fan_out), jnp.float32, -bound, bound)
    b = jax.random.uniform(kb, (1, fan_out), jnp.float32, -bound, bound)
    return w, b


if __name__ == "__main__":
    # Small shapes consistent with MLPClassifier(input_dim, hidden_dim, num_classes)
    batch, input_dim, hidden_dim, num_classes = 8, 32, 32, 4

    key = jax.random.PRNGKey(0)
    kx, k1, k2 = jax.random.split(key, 3)

    x = jax.random.normal(kx, (batch, input_dim), jnp.float32)
    w1, b1 = init_linear_params(k1, input_dim, hidden_dim)
    w2, b2 = init_linear_params(k2, hidden_dim, num_classes)

    # Pure-JAX reference of the module's forward semantics (f32).
    ref = jnp.maximum(x @ w1 + b1, 0.0) @ w2 + b2

    # f32 path: must match the reference tightly.
    out_f32 = jax.block_until_ready(
        mlp_forward(x, w1, b1, w2, b2, compute_dtype=jnp.float32))
    assert out_f32.shape == (batch, num_classes)
    assert jnp.allclose(out_f32, ref, atol=1e-5, rtol=1e-5)

    # bf16 MXU-operand path (f32 accumulation / bias / ReLU): looser tolerance.
    out_bf16 = jax.block_until_ready(
        mlp_forward(x, w1, b1, w2, b2, compute_dtype=jnp.bfloat16))
    assert out_bf16.shape == (batch, num_classes)
    assert jnp.allclose(out_bf16, ref, atol=5e-2, rtol=5e-2)

    print("KERNEL_OK")
</pallas_src>

<mosaic_0001>
module attributes {stable_mosaic.version = 11 : i64} {
  func.func @mlp_kernel(%arg0: i32, %arg1: memref<8x128xf32, #tpu.memory_space<vmem>>, %arg2: memref<128x128xf32, #tpu.memory_space<vmem>>, %arg3: memref<1x128xf32, #tpu.memory_space<vmem>>, %arg4: memref<128x128xf32, #tpu.memory_space<vmem>>, %arg5: memref<1x128xf32, #tpu.memory_space<vmem>>, %arg6: memref<8x128xf32, #tpu.memory_space<vmem>>) attributes {dimension_semantics = [#tpu.dimension_semantics<parallel>], iteration_bounds = array<i64: 1>, scalar_prefetch = 0 : i64, scratch_operands = 0 : i64, tpu.core_type = #tpu.core_type<tc>, window_params = [{transform_indices = @transform_0, window_bounds = array<i64: 8, 128>}, {pipeline_mode = #tpu.pipeline_mode<synchronous>, transform_indices = @transform_1, window_bounds = array<i64: 128, 128>}, {pipeline_mode = #tpu.pipeline_mode<synchronous>, transform_indices = @transform_2, window_bounds = array<i64: 1, 128>}, {pipeline_mode = #tpu.pipeline_mode<synchronous>, transform_indices = @transform_3, window_bounds = array<i64: 128, 128>}, {pipeline_mode = #tpu.pipeline_mode<synchronous>, transform_indices = @transform_4, window_bounds = array<i64: 1, 128>}, {transform_indices = @transform_5, window_bounds = array<i64: 8, 128>}]} {
    %c0 = arith.constant 0 : index
    %c0_0 = arith.constant 0 : index
    %0 = vector.load %arg1[%c0, %c0_0] : memref<8x128xf32, #tpu.memory_space<vmem>>, vector<8x128xf32>
    %c0_1 = arith.constant 0 : index
    %c0_2 = arith.constant 0 : index
    %1 = vector.load %arg2[%c0_1, %c0_2] : memref<128x128xf32, #tpu.memory_space<vmem>>, vector<128x128xf32>
    %cst = arith.constant dense<0.000000e+00> : vector<8x128xf32>
    %2 = tpu.matmul %0, %1, %cst {dimension_numbers = #tpu.dot_dimension_numbers<[1], [0], [0], [1], [0, 0, 1, 1], [], []>} : vector<8x128xf32>, vector<128x128xf32>, vector<8x128xf32> -> vector<8x128xf32>
    %c0_3 = arith.constant 0 : index
    %c0_4 = arith.constant 0 : index
    %3 = vector.load %arg3[%c0_3, %c0_4] : memref<1x128xf32, #tpu.memory_space<vmem>>, vector<1x128xf32>
    %4 = vector.broadcast %3 : vector<1x128xf32> to vector<8x128xf32>
    %5 = arith.addf %2, %4 : vector<8x128xf32>
    %cst_5 = arith.constant 0.000000e+00 : f32
    %6 = vector.broadcast %cst_5 : f32 to vector<8x128xf32>
    %7 = arith.maximumf %5, %6 : vector<8x128xf32>
    %c0_6 = arith.constant 0 : index
    %c0_7 = arith.constant 0 : index
    %8 = vector.load %arg4[%c0_6, %c0_7] : memref<128x128xf32, #tpu.memory_space<vmem>>, vector<128x128xf32>
    %cst_8 = arith.constant dense<0.000000e+00> : vector<8x128xf32>
    %9 = tpu.matmul %7, %8, %cst_8 {dimension_numbers = #tpu.dot_dimension_numbers<[1], [0], [0], [1], [0, 0, 1, 1], [], []>} : vector<8x128xf32>, vector<128x128xf32>, vector<8x128xf32> -> vector<8x128xf32>
    %c0_9 = arith.constant 0 : index
    %c0_10 = arith.constant 0 : index
    %10 = vector.load %arg5[%c0_9, %c0_10] : memref<1x128xf32, #tpu.memory_space<vmem>>, vector<1x128xf32>
    %11 = vector.broadcast %10 : vector<1x128xf32> to vector<8x128xf32>
    %12 = arith.addf %9, %11 : vector<8x128xf32>
    %c0_11 = arith.constant 0 : index
    %c0_12 = arith.constant 0 : index
    %13 = vector.load %arg6[%c0_11, %c0_12] : memref<8x128xf32, #tpu.memory_space<vmem>>, vector<8x128xf32>
    tpu.vector_store %arg6[%c0_11, %c0_12], %12 {strides = array<i32>} : memref<8x128xf32, #tpu.memory_space<vmem>>, vector<8x128xf32>,
    return
  }
  func.func @transform_0(%arg0: i32) -> (i32, i32) {
    %c0_i32 = arith.constant 0 : i32
    %c0_i32_0 = arith.constant 0 : i32
    return %arg0, %c0_i32 : i32, i32
  }
  func.func @transform_1(%arg0: i32) -> (i32, i32) {
    %c0_i32 = arith.constant 0 : i32
    %c0_i32_0 = arith.constant 0 : i32
    %c0_i32_1 = arith.constant 0 : i32
    return %c0_i32, %c0_i32_0 : i32, i32
  }
  func.func @transform_2(%arg0: i32) -> (i32, i32) {
    %c0_i32 = arith.constant 0 : i32
    %c0_i32_0 = arith.constant 0 : i32
    %c0_i32_1 = arith.constant 0 : i32
    return %c0_i32, %c0_i32_0 : i32, i32
  }
  func.func @transform_3(%arg0: i32) -> (i32, i32) {
    %c0_i32 = arith.constant 0 : i32
    %c0_i32_0 = arith.constant 0 : i32
    %c0_i32_1 = arith.constant 0 : i32
    return %c0_i32, %c0_i32_0 : i32, i32
  }
  func.func @transform_4(%arg0: i32) -> (i32, i32) {
    %c0_i32 = arith.constant 0 : i32
    %c0_i32_0 = arith.constant 0 : i32
    %c0_i32_1 = arith.constant 0 : i32
    return %c0_i32, %c0_i32_0 : i32, i32
  }
  func.func @transform_5(%arg0: i32) -> (i32, i32) {
    %c0_i32 = arith.constant 0 : i32
    %c0_i32_0 = arith.constant 0 : i32
    return %arg0, %c0_i32 : i32, i32
  }
}

</mosaic_0001>

<llo_original>
// kernel: mlp_forward.1
$region0: #{mlp_forward.1}
  #allocation0 [shape = 'u32[]', space=smem, size = 0x4, offset = 0x4, fixed_abs, tag = 'smem constant byte address 0x4 - core index']
  #allocation1 [shape = 'u32[144,128]{1,0:T(1,128)}', space=vmem, size = 0x12000, scoped, tag = 'internal scratch']
  %s0 = inlined_call_operand.vmem [shape: f32[8,128], index: 0, kind: input, shape index: {}]
  %s1 = inlined_call_operand.vmem [shape: f32[128,128], index: 1, kind: input, shape index: {}]
  %s2 = inlined_call_operand.vmem [shape: f32[1,128], index: 2, kind: input, shape index: {}]
  %s3 = inlined_call_operand.vmem [shape: f32[128,128], index: 3, kind: input, shape index: {}]
  %s4 = inlined_call_operand.vmem [shape: f32[1,128], index: 4, kind: input, shape index: {}]
  %s5 = inlined_call_operand.vmem [shape: f32[8,128], index: 5, kind: output, shape index: {}]
  %s6 = sld [smem:[#allocation0]]
  $region30: #{mlp_forward.1} parent=0
    _
  %s8 = ssub.s32 1, %s6
  %s9 = scalar_select 0, %s8, %s6
  // Predicated region
  $region2: #{mlp_forward.1} parent=0 // pred_check
    _
  $region3: #{mlp_forward.1} parent=0 // pred_check_branch
    %11 = sbr.rel (0) target = $region5
  $region4: #{mlp_forward.1} parent=0 // pred_region
    _
  $region5: #{mlp_forward.1} parent=0 // pred_fallthru
    _
  // Predicated region
  $region6: #{mlp_forward.1} parent=0 // pred_check
    _
  $region7: #{mlp_forward.1} parent=0 // pred_check_branch
    %13 = sbr.rel (0) target = $region9
  $region8: #{mlp_forward.1} parent=0 // pred_region
    _
  $region9: #{mlp_forward.1} parent=0 // pred_fallthru
    _
  // Predicated region
  $region10: #{mlp_forward.1} parent=0 // pred_check
    _
  $region11: #{mlp_forward.1} parent=0 // pred_check_branch
    %15 = sbr.rel (0) target = $region13
  $region12: #{mlp_forward.1} parent=0 // pred_region
    _
  $region13: #{mlp_forward.1} parent=0 // pred_fallthru
    _
  // Predicated region
  $region14: #{mlp_forward.1} parent=0 // pred_check
    _
  $region15: #{mlp_forward.1} parent=0 // pred_check_branch
    %17 = sbr.rel (0) target = $region17
  $region16: #{mlp_forward.1} parent=0 // pred_region
    _
  $region17: #{mlp_forward.1} parent=0 // pred_fallthru
    _
  // Predicated region
  $region18: #{mlp_forward.1} parent=0 // pred_check
    _
  $region19: #{mlp_forward.1} parent=0 // pred_check_branch
    %19 = sbr.rel (0) target = $region21
  $region20: #{mlp_forward.1} parent=0 // pred_region
    _
  $region21: #{mlp_forward.1} parent=0 // pred_fallthru
    _
  %v20 = vld [vmem:[%s0] sm:$0xff]
  %v21 = vld [vmem:[%s1] sm:$0xff]
  %v22 = vld [vmem:[%s1 + $0x8] sm:$0xff]
  %v23 = vld [vmem:[%s1 + $0x10] sm:$0xff]
  %v24 = vld [vmem:[%s1 + $0x18] sm:$0xff]
  %v25 = vld [vmem:[%s1 + $0x20] sm:$0xff]
  %v26 = vld [vmem:[%s1 + $0x28] sm:$0xff]
  %v27 = vld [vmem:[%s1 + $0x30] sm:$0xff]
  %v28 = vld [vmem:[%s1 + $0x38] sm:$0xff]
  %v29 = vld [vmem:[%s1 + $0x40] sm:$0xff]
  %v30 = vld [vmem:[%s1 + $0x48] sm:$0xff]
  %v31 = vld [vmem:[%s1 + $0x50] sm:$0xff]
  %v32 = vld [vmem:[%s1 + $0x58] sm:$0xff]
  %v33 = vld [vmem:[%s1 + $0x60] sm:$0xff]
  %v34 = vld [vmem:[%s1 + $0x68] sm:$0xff]
  %v35 = vld [vmem:[%s1 + $0x70] sm:$0xff]
  %v36 = vld [vmem:[%s1 + $0x78] sm:$0xff]
  %v37 = vld [vmem:[%s2] sm:$0x1]
  %v39 = vlaneseq
  %v40 = vshrl.u32 %v39, 7
  %v41 = vsub.s32 0, %v40
  %v42 = vrot.slane %v37, %v41
  %44 = vmatprep.subr.mxu0 0.0
  %45 = vmatpush1.msra.mxu0 %v21
  %46 = vmatprep.subr.mxu0 0.0
  %47 = vmatpush1.msra.mxu0 %v22
  %48 = vmatprep.subr.mxu0 0.0
  %49 = vmatpush1.msra.mxu0 %v23
  %50 = vmatprep.subr.mxu0 0.0
  %51 = vmatpush1.msra.mxu0 %v24
  %52 = vmatprep.subr.mxu0 0.0
  %53 = vmatpush1.msra.mxu0 %v25
  %54 = vmatprep.subr.mxu0 0.0
  %55 = vmatpush1.msra.mxu0 %v26
  %56 = vmatprep.subr.mxu0 0.0
  %57 = vmatpush1.msra.mxu0 %v27
  %58 = vmatprep.subr.mxu0 0.0
  %59 = vmatpush1.msra.mxu0 %v28
  %60 = vmatprep.subr.mxu0 0.0
  %61 = vmatpush1.msra.mxu0 %v29
  %62 = vmatprep.subr.mxu0 0.0
  %63 = vmatpush1.msra.mxu0 %v30
  %64 = vmatprep.subr.mxu0 0.0
  %65 = vmatpush1.msra.mxu0 %v31
  %66 = vmatprep.subr.mxu0 0.0
  %67 = vmatpush1.msra.mxu0 %v32
  %68 = vmatprep.subr.mxu0 0.0
  %69 = vmatpush1.msra.mxu0 %v33
  %70 = vmatprep.subr.mxu0 0.0
  %71 = vmatpush1.msra.mxu0 %v34
  %72 = vmatprep.subr.mxu0 0.0
  %73 = vmatpush1.msra.mxu0 %v35
  %74 = vmatprep.subr.mxu0 0.0
  %75 = vmatpush1.msra.mxu0 %v36
  %76 = vmatprep.subr.mxu0 0.0
  %77 = vmatpush1.msra.mxu0 0.0
  %78 = vmatprep.subr.mxu0 0.0
  %79 = vmatpush1.msra.mxu0 0.0
  %80 = vmatprep.subr.mxu0 0.0
  %81 = vmatpush1.msra.mxu0 0.0
  %82 = vmatprep.subr.mxu0 0.0
  %83 = vmatpush1.msra.mxu0 0.0
  %84 = vmatprep.subr.mxu0 0.0
  %85 = vmatpush1.msra.mxu0 0.0
  %86 = vmatprep.subr.mxu0 0.0
  %87 = vmatpush1.msra.mxu0 0.0
  %88 = vmatprep.subr.mxu0 0.0
  %89 = vmatpush1.msra.mxu0 0.0
  %90 = vmatprep.subr.mxu0 0.0
  %91 = vmatpush1.msra.mxu0 0.0
  %92 = vmatprep.subr.mxu0 0.0
  %93 = vmatpush1.msra.mxu0 0.0
  %94 = vmatprep.subr.mxu0 0.0
  %95 = vmatpush1.msra.mxu0 0.0
  %96 = vmatprep.subr.mxu0 0.0
  %97 = vmatpush1.msra.mxu0 0.0
  %98 = vmatprep.subr.mxu0 0.0
  %99 = vmatpush1.msra.mxu0 0.0
  %100 = vmatprep.subr.mxu0 0.0
  %101 = vmatpush1.msra.mxu0 0.0
  %102 = vmatprep.subr.mxu0 0.0
  %103 = vmatpush1.msra.mxu0 0.0
  %104 = vmatprep.subr.mxu0 0.0
  %105 = vmatpush1.msra.mxu0 0.0
  %106 = vmatprep.subr.mxu0 0.0
  %107 = vmatpush1.msra.mxu0 0.0
  %108 = vmatprep.mubr.f32.mxu0 0.0
  %109 = vmatmul.mubr.f32.gmra.mrb[0].mxu0 %v20
  %v110 = vpop.f32.mrb[0].mxu0
  %v111 = vadd.f32 %v42, %v110
  %v112 = vpop.f32.mrb[0].mxu0
  %113 = vdwg.mxu0
  %v114 = vmax.f32 %v111, 0.0
  %v115 = vld [vmem:[%s3] sm:$0xff]
  %v116 = vld [vmem:[%s3 + $0x8] sm:$0xff]
  %v117 = vld [vmem:[%s3 + $0x10] sm:$0xff]
  %v118 = vld [vmem:[%s3 + $0x18] sm:$0xff]
  %v119 = vld [vmem:[%s3 + $0x20] sm:$0xff]
  %v120 = vld [vmem:[%s3 + $0x28] sm:$0xff]
  %v121 = vld [vmem:[%s3 + $0x30] sm:$0xff]
  %v122 = vld [vmem:[%s3 + $0x38] sm:$0xff]
  %v123 = vld [vmem:[%s3 + $0x40] sm:$0xff]
  %v124 = vld [vmem:[%s3 + $0x48] sm:$0xff]
  %v125 = vld [vmem:[%s3 + $0x50] sm:$0xff]
  %v126 = vld [vmem:[%s3 + $0x58] sm:$0xff]
  %v127 = vld [vmem:[%s3 + $0x60] sm:$0xff]
  %v128 = vld [vmem:[%s3 + $0x68] sm:$0xff]
  %v129 = vld [vmem:[%s3 + $0x70] sm:$0xff]
  %v130 = vld [vmem:[%s3 + $0x78] sm:$0xff]
  %v131 = vld [vmem:[%s4] sm:$0x1]
  %v133 = vlaneseq
  %v134 = vshrl.u32 %v133, 7
  %v135 = vsub.s32 0, %v134
  %v136 = vrot.slane %v131, %v135
  %138 = vmatprep.subr.mxu0 0.0
  %139 = vmatpush1.msra.mxu0 %v115
  %140 = vmatprep.subr.mxu0 0.0
  %141 = vmatpush1.msra.mxu0 %v116
  %142 = vmatprep.subr.mxu0 0.0
  %143 = vmatpush1.msra.mxu0 %v117
  %144 = vmatprep.subr.mxu0 0.0
  %145 = vmatpush1.msra.mxu0 %v118
  %146 = vmatprep.subr.mxu0 0.0
  %147 = vmatpush1.msra.mxu0 %v119
  %148 = vmatprep.subr.mxu0 0.0
  %149 = vmatpush1.msra.mxu0 %v120
  %150 = vmatprep.subr.mxu0 0.0
  %151 = vmatpush1.msra.mxu0 %v121
  %152 = vmatprep.subr.mxu0 0.0
  %153 = vmatpush1.msra.mxu0 %v122
  %154 = vmatprep.subr.mxu0 0.0
  %155 = vmatpush1.msra.mxu0 %v123
  %156 = vmatprep.subr.mxu0 0.0
  %157 = vmatpush1.msra.mxu0 %v124
  %158 = vmatprep.subr.mxu0 0.0
  %159 = vmatpush1.msra.mxu0 %v125
  %160 = vmatprep.subr.mxu0 0.0
  %161 = vmatpush1.msra.mxu0 %v126
  %162 = vmatprep.subr.mxu0 0.0
  %163 = vmatpush1.msra.mxu0 %v127
  %164 = vmatprep.subr.mxu0 0.0
  %165 = vmatpush1.msra.mxu0 %v128
  %166 = vmatprep.subr.mxu0 0.0
  %167 = vmatpush1.msra.mxu0 %v129
  %168 = vmatprep.subr.mxu0 0.0
  %169 = vmatpush1.msra.mxu0 %v130
  %170 = vmatprep.subr.mxu0 0.0
  %171 = vmatpush1.msra.mxu0 0.0
  %172 = vmatprep.subr.mxu0 0.0
  %173 = vmatpush1.msra.mxu0 0.0
  %174 = vmatprep.subr.mxu0 0.0
  %175 = vmatpush1.msra.mxu0 0.0
  %176 = vmatprep.subr.mxu0 0.0
  %177 = vmatpush1.msra.mxu0 0.0
  %178 = vmatprep.subr.mxu0 0.0
  %179 = vmatpush1.msra.mxu0 0.0
  %180 = vmatprep.subr.mxu0 0.0
  %181 = vmatpush1.msra.mxu0 0.0
  %182 = vmatprep.subr.mxu0 0.0
  %183 = vmatpush1.msra.mxu0 0.0
  %184 = vmatprep.subr.mxu0 0.0
  %185 = vmatpush1.msra.mxu0 0.0
  %186 = vmatprep.subr.mxu0 0.0
  %187 = vmatpush1.msra.mxu0 0.0
  %188 = vmatprep.subr.mxu0 0.0
  %189 = vmatpush1.msra.mxu0 0.0
  %190 = vmatprep.subr.mxu0 0.0
  %191 = vmatpush1.msra.mxu0 0.0
  %192 = vmatprep.subr.mxu0 0.0
  %193 = vmatpush1.msra.mxu0 0.0
  %194 = vmatprep.subr.mxu0 0.0
  %195 = vmatpush1.msra.mxu0 0.0
  %196 = vmatprep.subr.mxu0 0.0
  %197 = vmatpush1.msra.mxu0 0.0
  %198 = vmatprep.subr.mxu0 0.0
  %199 = vmatpush1.msra.mxu0 0.0
  %200 = vmatprep.subr.mxu0 0.0
  %201 = vmatpush1.msra.mxu0 0.0
  %202 = vmatprep.mubr.f32.mxu0 0.0
  %203 = vmatmul.mubr.f32.gmra.mrb[0].mxu0 %v114
  %v204 = vpop.f32.mrb[0].mxu0
  %v205 = vadd.f32 %v136, %v204
  %v206 = vpop.f32.mrb[0].mxu0
  %207 = vdwg.mxu0
  %208 = vst [vmem:[%s5] sm:$0xff] %v205
  // Predicated region
  $region22: #{mlp_forward.1} parent=0 // pred_check
    _
  $region23: #{mlp_forward.1} parent=0 // pred_check_branch
    %210 = sbr.rel (0) target = $region25
  $region24: #{mlp_forward.1} parent=0 // pred_region
    _
  $region25: #{mlp_forward.1} parent=0 // pred_fallthru
    _
  // Predicated region
  $region26: #{mlp_forward.1} parent=0 // pred_check
    _
  $region27: #{mlp_forward.1} parent=0 // pred_check_branch
    %212 = sbr.rel (0) target = $region29
  $region28: #{mlp_forward.1} parent=0 // pred_region
    _
  $region29: #{mlp_forward.1} parent=0 // pred_fallthru
    _

</llo_original>
